<compile_context>
chip_gen: v5e
topology: v5e:2x2
jax: 0.10.0
libtpu: 0.0.40
codegen_flags: <defaults>
</compile_context>

<pallas_src>
import functools

import jax
import jax.numpy as jnp
from jax import lax
from jax.experimental import pallas as pl
from jax.experimental.pallas import tpu as pltpu

_LANES = 128
_SUBLANES = 8

# int32 views of the lowbias32 / golden-ratio constants.
_C1 = 0x7FEB352D                      #  2146121005
_C2 = 0x846CA68B - (1 << 32)          # -2073680245
_GOLD = 0x9E3779B9 - (1 << 32)        # -1640531527


def _pick_row_tile(rows, max_rows=2048):
    """Largest divisor of `rows` that is a multiple of 8 and <= max_rows."""
    t = min(rows, max_rows)
    t -= t % _SUBLANES
    while t >= _SUBLANES:
        if rows % t == 0:
            return t
        t -= _SUBLANES
    return rows


def _srl(v, k):
    """Logical right shift of an int32 array by a static amount."""
    return lax.shift_right_logical(v, jnp.full(v.shape, k, dtype=v.dtype))


def _lowbias32(v):
    """lowbias32 integer hash (Wellons): good avalanche, VPU-only ops."""
    v = v ^ _srl(v, 16)
    v = v * jnp.int32(_C1)
    v = v ^ _srl(v, 15)
    v = v * jnp.int32(_C2)
    v = v ^ _srl(v, 16)
    return v


# ----------------------------------------------------------------------------- kernel

def _mc_dropout_var_kernel(seed_ref, x_ref, unc_ref, cnt_ref, *,
                           num_samples, keep_prob):
    x = x_ref[...].astype(jnp.float32)
    shape = x.shape
    row_tile = shape[0]

    # Unique per-element counter (global across the grid, so results are independent
    # of the tiling / megacore sharding of the "parallel" axis).
    row_in_tile = lax.broadcasted_iota(jnp.int32, shape, 0)
    col = lax.broadcasted_iota(jnp.int32, shape, 1)
    global_row = pl.program_id(0) * jnp.int32(row_tile) + row_in_tile
    elem = global_row * jnp.int32(_LANES) + col

    seed = seed_ref[0]
    # Hoisted hash pre-image: distinct counter per (element, sample), mixed with seed.
    pre = elem * jnp.int32(num_samples) + seed * jnp.int32(_GOLD)

    mask24 = jnp.int32((1 << 24) - 1)
    thresh = jnp.int32(int(round(keep_prob * float(1 << 24))))

    count = jnp.zeros(shape, jnp.float32)
    for s in range(num_samples):                      # static unroll (10 draws)
        h = _lowbias32(pre + jnp.int32(s))
        keep = (jnp.bitwise_and(h, mask24) < thresh).astype(jnp.float32)
        count = count + keep

    n = float(num_samples)
    scale = (1.0 / keep_prob) if keep_prob > 0.0 else 0.0
    xs = x * jnp.float32(scale)
    var = (xs * xs) * count * (n - count) * jnp.float32(1.0 / (n * (n - 1.0)))

    unc_ref[...] = var.astype(unc_ref.dtype)
    cnt_ref[...] = count.astype(cnt_ref.dtype)


# ----------------------------------------------------------------------------- wrapper

def mc_dropout_uncertainty(x, seed, *, num_samples=10, dropout_rate=0.5):
    """Returns (uncertainty, keep_counts), both with x's shape.

    `uncertainty` equals torch.var(torch.stack([dropout(x) for _ in range(N)]), dim=0)
    (training-mode dropout, unbiased variance) for the masks realized in-kernel.
    `keep_counts` (number of kept samples per element) is returned for verification.
    """
    keep_prob = 1.0 - dropout_rate
    orig_shape = x.shape
    flat = x.reshape(-1).astype(jnp.float32)
    n_elem = flat.shape[0]

    # Lane-dense layout: flatten, pad to a multiple of 8*128, view as (rows, 128).
    block = _LANES * _SUBLANES
    padded = pl.cdiv(n_elem, block) * block
    rows = padded // _LANES
    x2d = jnp.pad(flat, (0, padded - n_elem)).reshape(rows, _LANES)

    row_tile = _pick_row_tile(rows)
    grid = (rows // row_tile,)

    kernel = functools.partial(_mc_dropout_var_kernel,
                               num_samples=num_samples, keep_prob=keep_prob)
    grid_spec = pltpu.PrefetchScalarGridSpec(
        num_scalar_prefetch=1,
        grid=grid,
        in_specs=[pl.BlockSpec((row_tile, _LANES), lambda i, seed_ref: (i, 0))],
        out_specs=[pl.BlockSpec((row_tile, _LANES), lambda i, seed_ref: (i, 0)),
                   pl.BlockSpec((row_tile, _LANES), lambda i, seed_ref: (i, 0))],
    )

    seed_arr = jnp.reshape(jnp.asarray(seed, jnp.int32), (1,))
    unc2d, cnt2d = pl.pallas_call(
        kernel,
        out_shape=(jax.ShapeDtypeStruct((rows, _LANES), jnp.float32),
                   jax.ShapeDtypeStruct((rows, _LANES), jnp.float32)),
        grid_spec=grid_spec,
        compiler_params=pltpu.CompilerParams(dimension_semantics=("parallel",)),
    )(seed_arr, x2d)

    unc = unc2d.reshape(-1)[:n_elem].reshape(orig_shape)
    cnt = cnt2d.reshape(-1)[:n_elem].reshape(orig_shape)
    return unc, cnt


def uncertainty_forward(x, seed, *, num_samples=10, dropout_rate=0.5):
    """The module forward: just the uncertainty map."""
    # TODO(synk): eval-mode dropout (identity) would make the variance identically zero;
    # only the training-mode MC-dropout path (the meaningful one) is implemented.
    return mc_dropout_uncertainty(x, seed, num_samples=num_samples,
                                  dropout_rate=dropout_rate)[0]


# ----------------------------------------------------------------------------- reference

def _reference_var_from_counts(x, cnt, num_samples, keep_prob):
    """Literal stack-then-unbiased-var (torch semantics) given the realized keep-counts.

    Variance over the sample axis is permutation-invariant, so placing the `cnt` kept
    samples first reproduces exactly what torch.stack + torch.var(dim=0) computes.
    """
    scale = 1.0 / keep_prob
    flat_x = x.reshape(-1) * scale
    flat_k = cnt.reshape(-1)
    idx = jnp.arange(num_samples, dtype=jnp.float32)[:, None]
    masks = (idx < flat_k[None, :]).astype(jnp.float32)     # (N, numel)
    samples = masks * flat_x[None, :]
    return jnp.var(samples, axis=0, ddof=1).reshape(x.shape)


# ----------------------------------------------------------------------------- main

if __name__ == "__main__":
    B, C, H, W = 2, 4, 16, 16          # small shape consistent with the module (any 4-D x works)
    NUM_SAMPLES, P_DROP = 10, 0.5

    x = jax.random.normal(jax.random.PRNGKey(0), (B, C, H, W), jnp.float32)

    fwd = jax.jit(functools.partial(mc_dropout_uncertainty,
                                    num_samples=NUM_SAMPLES, dropout_rate=P_DROP))
    unc, cnt = jax.block_until_ready(fwd(x, 1234))

    assert unc.shape == x.shape, unc.shape
    assert cnt.shape == x.shape, cnt.shape

    # Keep-counts must be integers in [0, N] with a ~Binomial(N, 1-p) mean.
    assert bool(jnp.all(cnt == jnp.round(cnt))), "non-integer keep counts"
    assert bool(jnp.all((cnt >= 0) & (cnt <= NUM_SAMPLES))), "keep counts out of range"
    mean_cnt = float(jnp.mean(cnt))
    assert 4.5 < mean_cnt < 5.5, f"keep-rate off: mean count = {mean_cnt}"

    # Uncertainty must equal the literal stack + unbiased-variance reference for the
    # realized masks.
    ref = _reference_var_from_counts(x, cnt, NUM_SAMPLES, 1.0 - P_DROP)
    max_err = float(jnp.max(jnp.abs(unc - ref)))
    assert max_err < 1e-4, f"max abs error too large: {max_err}"
    assert bool(jnp.all(unc >= 0.0))

    print("KERNEL_OK")
</pallas_src>

<mosaic_0001>
module attributes {stable_mosaic.version = 11 : i64} {
  func.func @_mc_dropout_var_kernel(%arg0: i32, %arg1: memref<1xi32, #tpu.memory_space<smem>>, %arg2: memref<16x128xf32, #tpu.memory_space<vmem>>, %arg3: memref<16x128xf32, #tpu.memory_space<vmem>>, %arg4: memref<16x128xf32, #tpu.memory_space<vmem>>) attributes {dimension_semantics = [#tpu.dimension_semantics<parallel>], iteration_bounds = array<i64: 1>, scalar_prefetch = 1 : i64, scratch_operands = 0 : i64, tpu.core_type = #tpu.core_type<tc>, window_params = [{transform_indices = @transform_0, window_bounds = array<i64: 16, 128>}, {transform_indices = @transform_1, window_bounds = array<i64: 16, 128>}, {transform_indices = @transform_2, window_bounds = array<i64: 16, 128>}]} {
    %c0 = arith.constant 0 : index
    %c0_0 = arith.constant 0 : index
    %0 = vector.load %arg2[%c0, %c0_0] : memref<16x128xf32, #tpu.memory_space<vmem>>, vector<16x128xf32>
    %1 = tpu.iota {dimensions = array<i32: 0>} : vector<16x128xi32>
    %2 = tpu.iota {dimensions = array<i32: 1>} : vector<16x128xi32>
    %c16_i32 = arith.constant 16 : i32
    %3 = arith.muli %arg0, %c16_i32 : i32
    %4 = vector.broadcast %3 : i32 to vector<16x128xi32>
    %5 = arith.addi %4, %1 : vector<16x128xi32>
    %c128_i32 = arith.constant 128 : i32
    %6 = vector.broadcast %c128_i32 : i32 to vector<16x128xi32>
    %7 = arith.muli %5, %6 : vector<16x128xi32>
    %8 = arith.addi %7, %2 : vector<16x128xi32>
    %c0_1 = arith.constant 0 : index
    %9 = memref.load %arg1[%c0_1] : memref<1xi32, #tpu.memory_space<smem>>
    %c10_i32 = arith.constant 10 : i32
    %10 = vector.broadcast %c10_i32 : i32 to vector<16x128xi32>
    %11 = arith.muli %8, %10 : vector<16x128xi32>
    %c-1640531527_i32 = arith.constant -1640531527 : i32
    %12 = arith.muli %9, %c-1640531527_i32 : i32
    %13 = vector.broadcast %12 : i32 to vector<16x128xi32>
    %14 = arith.addi %11, %13 : vector<16x128xi32>
    %cst = arith.constant 0.000000e+00 : f32
    %15 = vector.broadcast %cst : f32 to vector<16x128xf32>
    %c0_i32 = arith.constant 0 : i32
    %16 = vector.broadcast %c0_i32 : i32 to vector<16x128xi32>
    %17 = arith.addi %14, %16 : vector<16x128xi32>
    %c16_i32_2 = arith.constant 16 : i32
    %18 = vector.broadcast %c16_i32_2 : i32 to vector<16x128xi32>
    %19 = arith.shrui %17, %18 : vector<16x128xi32>
    %20 = arith.xori %17, %19 : vector<16x128xi32>
    %c2146121005_i32 = arith.constant 2146121005 : i32
    %21 = vector.broadcast %c2146121005_i32 : i32 to vector<16x128xi32>
    %22 = arith.muli %20, %21 : vector<16x128xi32>
    %c15_i32 = arith.constant 15 : i32
    %23 = vector.broadcast %c15_i32 : i32 to vector<16x128xi32>
    %24 = arith.shrui %22, %23 : vector<16x128xi32>
    %25 = arith.xori %22, %24 : vector<16x128xi32>
    %c-2073254261_i32 = arith.constant -2073254261 : i32
    %26 = vector.broadcast %c-2073254261_i32 : i32 to vector<16x128xi32>
    %27 = arith.muli %25, %26 : vector<16x128xi32>
    %c16_i32_3 = arith.constant 16 : i32
    %28 = vector.broadcast %c16_i32_3 : i32 to vector<16x128xi32>
    %29 = arith.shrui %27, %28 : vector<16x128xi32>
    %30 = arith.xori %27, %29 : vector<16x128xi32>
    %c16777215_i32 = arith.constant 16777215 : i32
    %31 = vector.broadcast %c16777215_i32 : i32 to vector<16x128xi32>
    %32 = arith.andi %30, %31 : vector<16x128xi32>
    %c8388608_i32 = arith.constant 8388608 : i32
    %33 = vector.broadcast %c8388608_i32 : i32 to vector<16x128xi32>
    %34 = arith.cmpi slt, %32, %33 : vector<16x128xi32>
    %35 = arith.extui %34 : vector<16x128xi1> to vector<16x128xi32>
    %36 = arith.sitofp %35 : vector<16x128xi32> to vector<16x128xf32>
    %37 = arith.addf %15, %36 : vector<16x128xf32>
    %c1_i32 = arith.constant 1 : i32
    %38 = vector.broadcast %c1_i32 : i32 to vector<16x128xi32>
    %39 = arith.addi %14, %38 : vector<16x128xi32>
    %c16_i32_4 = arith.constant 16 : i32
    %40 = vector.broadcast %c16_i32_4 : i32 to vector<16x128xi32>
    %41 = arith.shrui %39, %40 : vector<16x128xi32>
    %42 = arith.xori %39, %41 : vector<16x128xi32>
    %c2146121005_i32_5 = arith.constant 2146121005 : i32
    %43 = vector.broadcast %c2146121005_i32_5 : i32 to vector<16x128xi32>
    %44 = arith.muli %42, %43 : vector<16x128xi32>
    %c15_i32_6 = arith.constant 15 : i32
    %45 = vector.broadcast %c15_i32_6 : i32 to vector<16x128xi32>
    %46 = arith.shrui %44, %45 : vector<16x128xi32>
    %47 = arith.xori %44, %46 : vector<16x128xi32>
    %c-2073254261_i32_7 = arith.constant -2073254261 : i32
    %48 = vector.broadcast %c-2073254261_i32_7 : i32 to vector<16x128xi32>
    %49 = arith.muli %47, %48 : vector<16x128xi32>
    %c16_i32_8 = arith.constant 16 : i32
    %50 = vector.broadcast %c16_i32_8 : i32 to vector<16x128xi32>
    %51 = arith.shrui %49, %50 : vector<16x128xi32>
    %52 = arith.xori %49, %51 : vector<16x128xi32>
    %c16777215_i32_9 = arith.constant 16777215 : i32
    %53 = vector.broadcast %c16777215_i32_9 : i32 to vector<16x128xi32>
    %54 = arith.andi %52, %53 : vector<16x128xi32>
    %c8388608_i32_10 = arith.constant 8388608 : i32
    %55 = vector.broadcast %c8388608_i32_10 : i32 to vector<16x128xi32>
    %56 = arith.cmpi slt, %54, %55 : vector<16x128xi32>
    %57 = arith.extui %56 : vector<16x128xi1> to vector<16x128xi32>
    %58 = arith.sitofp %57 : vector<16x128xi32> to vector<16x128xf32>
    %59 = arith.addf %37, %58 : vector<16x128xf32>
    %c2_i32 = arith.constant 2 : i32
    %60 = vector.broadcast %c2_i32 : i32 to vector<16x128xi32>
    %61 = arith.addi %14, %60 : vector<16x128xi32>
    %c16_i32_11 = arith.constant 16 : i32
    %62 = vector.broadcast %c16_i32_11 : i32 to vector<16x128xi32>
    %63 = arith.shrui %61, %62 : vector<16x128xi32>
    %64 = arith.xori %61, %63 : vector<16x128xi32>
    %c2146121005_i32_12 = arith.constant 2146121005 : i32
    %65 = vector.broadcast %c2146121005_i32_12 : i32 to vector<16x128xi32>
    %66 = arith.muli %64, %65 : vector<16x128xi32>
    %c15_i32_13 = arith.constant 15 : i32
    %67 = vector.broadcast %c15_i32_13 : i32 to vector<16x128xi32>
    %68 = arith.shrui %66, %67 : vector<16x128xi32>
    %69 = arith.xori %66, %68 : vector<16x128xi32>
    %c-2073254261_i32_14 = arith.constant -2073254261 : i32
    %70 = vector.broadcast %c-2073254261_i32_14 : i32 to vector<16x128xi32>
    %71 = arith.muli %69, %70 : vector<16x128xi32>
    %c16_i32_15 = arith.constant 16 : i32
    %72 = vector.broadcast %c16_i32_15 : i32 to vector<16x128xi32>
    %73 = arith.shrui %71, %72 : vector<16x128xi32>
    %74 = arith.xori %71, %73 : vector<16x128xi32>
    %c16777215_i32_16 = arith.constant 16777215 : i32
    %75 = vector.broadcast %c16777215_i32_16 : i32 to vector<16x128xi32>
    %76 = arith.andi %74, %75 : vector<16x128xi32>
    %c8388608_i32_17 = arith.constant 8388608 : i32
    %77 = vector.broadcast %c8388608_i32_17 : i32 to vector<16x128xi32>
    %78 = arith.cmpi slt, %76, %77 : vector<16x128xi32>
    %79 = arith.extui %78 : vector<16x128xi1> to vector<16x128xi32>
    %80 = arith.sitofp %79 : vector<16x128xi32> to vector<16x128xf32>
    %81 = arith.addf %59, %80 : vector<16x128xf32>
    %c3_i32 = arith.constant 3 : i32
    %82 = vector.broadcast %c3_i32 : i32 to vector<16x128xi32>
    %83 = arith.addi %14, %82 : vector<16x128xi32>
    %c16_i32_18 = arith.constant 16 : i32
    %84 = vector.broadcast %c16_i32_18 : i32 to vector<16x128xi32>
    %85 = arith.shrui %83, %84 : vector<16x128xi32>
    %86 = arith.xori %83, %85 : vector<16x128xi32>
    %c2146121005_i32_19 = arith.constant 2146121005 : i32
    %87 = vector.broadcast %c2146121005_i32_19 : i32 to vector<16x128xi32>
    %88 = arith.muli %86, %87 : vector<16x128xi32>
    %c15_i32_20 = arith.constant 15 : i32
    %89 = vector.broadcast %c15_i32_20 : i32 to vector<16x128xi32>
    %90 = arith.shrui %88, %89 : vector<16x128xi32>
    %91 = arith.xori %88, %90 : vector<16x128xi32>
    %c-2073254261_i32_21 = arith.constant -2073254261 : i32
    %92 = vector.broadcast %c-2073254261_i32_21 : i32 to vector<16x128xi32>
    %93 = arith.muli %91, %92 : vector<16x128xi32>
    %c16_i32_22 = arith.constant 16 : i32
    %94 = vector.broadcast %c16_i32_22 : i32 to vector<16x128xi32>
    %95 = arith.shrui %93, %94 : vector<16x128xi32>
    %96 = arith.xori %93, %95 : vector<16x128xi32>
    %c16777215_i32_23 = arith.constant 16777215 : i32
    %97 = vector.broadcast %c16777215_i32_23 : i32 to vector<16x128xi32>
    %98 = arith.andi %96, %97 : vector<16x128xi32>
    %c8388608_i32_24 = arith.constant 8388608 : i32
    %99 = vector.broadcast %c8388608_i32_24 : i32 to vector<16x128xi32>
    %100 = arith.cmpi slt, %98, %99 : vector<16x128xi32>
    %101 = arith.extui %100 : vector<16x128xi1> to vector<16x128xi32>
    %102 = arith.sitofp %101 : vector<16x128xi32> to vector<16x128xf32>
    %103 = arith.addf %81, %102 : vector<16x128xf32>
    %c4_i32 = arith.constant 4 : i32
    %104 = vector.broadcast %c4_i32 : i32 to vector<16x128xi32>
    %105 = arith.addi %14, %104 : vector<16x128xi32>
    %c16_i32_25 = arith.constant 16 : i32
    %106 = vector.broadcast %c16_i32_25 : i32 to vector<16x128xi32>
    %107 = arith.shrui %105, %106 : vector<16x128xi32>
    %108 = arith.xori %105, %107 : vector<16x128xi32>
    %c2146121005_i32_26 = arith.constant 2146121005 : i32
    %109 = vector.broadcast %c2146121005_i32_26 : i32 to vector<16x128xi32>
    %110 = arith.muli %108, %109 : vector<16x128xi32>
    %c15_i32_27 = arith.constant 15 : i32
    %111 = vector.broadcast %c15_i32_27 : i32 to vector<16x128xi32>
    %112 = arith.shrui %110, %111 : vector<16x128xi32>
    %113 = arith.xori %110, %112 : vector<16x128xi32>
    %c-2073254261_i32_28 = arith.constant -2073254261 : i32
    %114 = vector.broadcast %c-2073254261_i32_28 : i32 to vector<16x128xi32>
    %115 = arith.muli %113, %114 : vector<16x128xi32>
    %c16_i32_29 = arith.constant 16 : i32
    %116 = vector.broadcast %c16_i32_29 : i32 to vector<16x128xi32>
    %117 = arith.shrui %115, %116 : vector<16x128xi32>
    %118 = arith.xori %115, %117 : vector<16x128xi32>
    %c16777215_i32_30 = arith.constant 16777215 : i32
    %119 = vector.broadcast %c16777215_i32_30 : i32 to vector<16x128xi32>
    %120 = arith.andi %118, %119 : vector<16x128xi32>
    %c8388608_i32_31 = arith.constant 8388608 : i32
    %121 = vector.broadcast %c8388608_i32_31 : i32 to vector<16x128xi32>
    %122 = arith.cmpi slt, %120, %121 : vector<16x128xi32>
    %123 = arith.extui %122 : vector<16x128xi1> to vector<16x128xi32>
    %124 = arith.sitofp %123 : vector<16x128xi32> to vector<16x128xf32>
    %125 = arith.addf %103, %124 : vector<16x128xf32>
    %c5_i32 = arith.constant 5 : i32
    %126 = vector.broadcast %c5_i32 : i32 to vector<16x128xi32>
    %127 = arith.addi %14, %126 : vector<16x128xi32>
    %c16_i32_32 = arith.constant 16 : i32
    %128 = vector.broadcast %c16_i32_32 : i32 to vector<16x128xi32>
    %129 = arith.shrui %127, %128 : vector<16x128xi32>
    %130 = arith.xori %127, %129 : vector<16x128xi32>
    %c2146121005_i32_33 = arith.constant 2146121005 : i32
    %131 = vector.broadcast %c2146121005_i32_33 : i32 to vector<16x128xi32>
    %132 = arith.muli %130, %131 : vector<16x128xi32>
    %c15_i32_34 = arith.constant 15 : i32
    %133 = vector.broadcast %c15_i32_34 : i32 to vector<16x128xi32>
    %134 = arith.shrui %132, %133 : vector<16x128xi32>
    %135 = arith.xori %132, %134 : vector<16x128xi32>
    %c-2073254261_i32_35 = arith.constant -2073254261 : i32
    %136 = vector.broadcast %c-2073254261_i32_35 : i32 to vector<16x128xi32>
    %137 = arith.muli %135, %136 : vector<16x128xi32>
    %c16_i32_36 = arith.constant 16 : i32
    %138 = vector.broadcast %c16_i32_36 : i32 to vector<16x128xi32>
    %139 = arith.shrui %137, %138 : vector<16x128xi32>
    %140 = arith.xori %137, %139 : vector<16x128xi32>
    %c16777215_i32_37 = arith.constant 16777215 : i32
    %141 = vector.broadcast %c16777215_i32_37 : i32 to vector<16x128xi32>
    %142 = arith.andi %140, %141 : vector<16x128xi32>
    %c8388608_i32_38 = arith.constant 8388608 : i32
    %143 = vector.broadcast %c8388608_i32_38 : i32 to vector<16x128xi32>
    %144 = arith.cmpi slt, %142, %143 : vector<16x128xi32>
    %145 = arith.extui %144 : vector<16x128xi1> to vector<16x128xi32>
    %146 = arith.sitofp %145 : vector<16x128xi32> to vector<16x128xf32>
    %147 = arith.addf %125, %146 : vector<16x128xf32>
    %c6_i32 = arith.constant 6 : i32
    %148 = vector.broadcast %c6_i32 : i32 to vector<16x128xi32>
    %149 = arith.addi %14, %148 : vector<16x128xi32>
    %c16_i32_39 = arith.constant 16 : i32
    %150 = vector.broadcast %c16_i32_39 : i32 to vector<16x128xi32>
    %151 = arith.shrui %149, %150 : vector<16x128xi32>
    %152 = arith.xori %149, %151 : vector<16x128xi32>
    %c2146121005_i32_40 = arith.constant 2146121005 : i32
    %153 = vector.broadcast %c2146121005_i32_40 : i32 to vector<16x128xi32>
    %154 = arith.muli %152, %153 : vector<16x128xi32>
    %c15_i32_41 = arith.constant 15 : i32
    %155 = vector.broadcast %c15_i32_41 : i32 to vector<16x128xi32>
    %156 = arith.shrui %154, %155 : vector<16x128xi32>
    %157 = arith.xori %154, %156 : vector<16x128xi32>
    %c-2073254261_i32_42 = arith.constant -2073254261 : i32
    %158 = vector.broadcast %c-2073254261_i32_42 : i32 to vector<16x128xi32>
    %159 = arith.muli %157, %158 : vector<16x128xi32>
    %c16_i32_43 = arith.constant 16 : i32
    %160 = vector.broadcast %c16_i32_43 : i32 to vector<16x128xi32>
    %161 = arith.shrui %159, %160 : vector<16x128xi32>
    %162 = arith.xori %159, %161 : vector<16x128xi32>
    %c16777215_i32_44 = arith.constant 16777215 : i32
    %163 = vector.broadcast %c16777215_i32_44 : i32 to vector<16x128xi32>
    %164 = arith.andi %162, %163 : vector<16x128xi32>
    %c8388608_i32_45 = arith.constant 8388608 : i32
    %165 = vector.broadcast %c8388608_i32_45 : i32 to vector<16x128xi32>
    %166 = arith.cmpi slt, %164, %165 : vector<16x128xi32>
    %167 = arith.extui %166 : vector<16x128xi1> to vector<16x128xi32>
    %168 = arith.sitofp %167 : vector<16x128xi32> to vector<16x128xf32>
    %169 = arith.addf %147, %168 : vector<16x128xf32>
    %c7_i32 = arith.constant 7 : i32
    %170 = vector.broadcast %c7_i32 : i32 to vector<16x128xi32>
    %171 = arith.addi %14, %170 : vector<16x128xi32>
    %c16_i32_46 = arith.constant 16 : i32
    %172 = vector.broadcast %c16_i32_46 : i32 to vector<16x128xi32>
    %173 = arith.shrui %171, %172 : vector<16x128xi32>
    %174 = arith.xori %171, %173 : vector<16x128xi32>
    %c2146121005_i32_47 = arith.constant 2146121005 : i32
    %175 = vector.broadcast %c2146121005_i32_47 : i32 to vector<16x128xi32>
    %176 = arith.muli %174, %175 : vector<16x128xi32>
    %c15_i32_48 = arith.constant 15 : i32
    %177 = vector.broadcast %c15_i32_48 : i32 to vector<16x128xi32>
    %178 = arith.shrui %176, %177 : vector<16x128xi32>
    %179 = arith.xori %176, %178 : vector<16x128xi32>
    %c-2073254261_i32_49 = arith.constant -2073254261 : i32
    %180 = vector.broadcast %c-2073254261_i32_49 : i32 to vector<16x128xi32>
    %181 = arith.muli %179, %180 : vector<16x128xi32>
    %c16_i32_50 = arith.constant 16 : i32
    %182 = vector.broadcast %c16_i32_50 : i32 to vector<16x128xi32>
    %183 = arith.shrui %181, %182 : vector<16x128xi32>
    %184 = arith.xori %181, %183 : vector<16x128xi32>
    %c16777215_i32_51 = arith.constant 16777215 : i32
    %185 = vector.broadcast %c16777215_i32_51 : i32 to vector<16x128xi32>
    %186 = arith.andi %184, %185 : vector<16x128xi32>
    %c8388608_i32_52 = arith.constant 8388608 : i32
    %187 = vector.broadcast %c8388608_i32_52 : i32 to vector<16x128xi32>
    %188 = arith.cmpi slt, %186, %187 : vector<16x128xi32>
    %189 = arith.extui %188 : vector<16x128xi1> to vector<16x128xi32>
    %190 = arith.sitofp %189 : vector<16x128xi32> to vector<16x128xf32>
    %191 = arith.addf %169, %190 : vector<16x128xf32>
    %c8_i32 = arith.constant 8 : i32
    %192 = vector.broadcast %c8_i32 : i32 to vector<16x128xi32>
    %193 = arith.addi %14, %192 : vector<16x128xi32>
    %c16_i32_53 = arith.constant 16 : i32
    %194 = vector.broadcast %c16_i32_53 : i32 to vector<16x128xi32>
    %195 = arith.shrui %193, %194 : vector<16x128xi32>
    %196 = arith.xori %193, %195 : vector<16x128xi32>
    %c2146121005_i32_54 = arith.constant 2146121005 : i32
    %197 = vector.broadcast %c2146121005_i32_54 : i32 to vector<16x128xi32>
    %198 = arith.muli %196, %197 : vector<16x128xi32>
    %c15_i32_55 = arith.constant 15 : i32
    %199 = vector.broadcast %c15_i32_55 : i32 to vector<16x128xi32>
    %200 = arith.shrui %198, %199 : vector<16x128xi32>
    %201 = arith.xori %198, %200 : vector<16x128xi32>
    %c-2073254261_i32_56 = arith.constant -2073254261 : i32
    %202 = vector.broadcast %c-2073254261_i32_56 : i32 to vector<16x128xi32>
    %203 = arith.muli %201, %202 : vector<16x128xi32>
    %c16_i32_57 = arith.constant 16 : i32
    %204 = vector.broadcast %c16_i32_57 : i32 to vector<16x128xi32>
    %205 = arith.shrui %203, %204 : vector<16x128xi32>
    %206 = arith.xori %203, %205 : vector<16x128xi32>
    %c16777215_i32_58 = arith.constant 16777215 : i32
    %207 = vector.broadcast %c16777215_i32_58 : i32 to vector<16x128xi32>
    %208 = arith.andi %206, %207 : vector<16x128xi32>
    %c8388608_i32_59 = arith.constant 8388608 : i32
    %209 = vector.broadcast %c8388608_i32_59 : i32 to vector<16x128xi32>
    %210 = arith.cmpi slt, %208, %209 : vector<16x128xi32>
    %211 = arith.extui %210 : vector<16x128xi1> to vector<16x128xi32>
    %212 = arith.sitofp %211 : vector<16x128xi32> to vector<16x128xf32>
    %213 = arith.addf %191, %212 : vector<16x128xf32>
    %c9_i32 = arith.constant 9 : i32
    %214 = vector.broadcast %c9_i32 : i32 to vector<16x128xi32>
    %215 = arith.addi %14, %214 : vector<16x128xi32>
    %c16_i32_60 = arith.constant 16 : i32
    %216 = vector.broadcast %c16_i32_60 : i32 to vector<16x128xi32>
    %217 = arith.shrui %215, %216 : vector<16x128xi32>
    %218 = arith.xori %215, %217 : vector<16x128xi32>
    %c2146121005_i32_61 = arith.constant 2146121005 : i32
    %219 = vector.broadcast %c2146121005_i32_61 : i32 to vector<16x128xi32>
    %220 = arith.muli %218, %219 : vector<16x128xi32>
    %c15_i32_62 = arith.constant 15 : i32
    %221 = vector.broadcast %c15_i32_62 : i32 to vector<16x128xi32>
    %222 = arith.shrui %220, %221 : vector<16x128xi32>
    %223 = arith.xori %220, %222 : vector<16x128xi32>
    %c-2073254261_i32_63 = arith.constant -2073254261 : i32
    %224 = vector.broadcast %c-2073254261_i32_63 : i32 to vector<16x128xi32>
    %225 = arith.muli %223, %224 : vector<16x128xi32>
    %c16_i32_64 = arith.constant 16 : i32
    %226 = vector.broadcast %c16_i32_64 : i32 to vector<16x128xi32>
    %227 = arith.shrui %225, %226 : vector<16x128xi32>
    %228 = arith.xori %225, %227 : vector<16x128xi32>
    %c16777215_i32_65 = arith.constant 16777215 : i32
    %229 = vector.broadcast %c16777215_i32_65 : i32 to vector<16x128xi32>
    %230 = arith.andi %228, %229 : vector<16x128xi32>
    %c8388608_i32_66 = arith.constant 8388608 : i32
    %231 = vector.broadcast %c8388608_i32_66 : i32 to vector<16x128xi32>
    %232 = arith.cmpi slt, %230, %231 : vector<16x128xi32>
    %233 = arith.extui %232 : vector<16x128xi1> to vector<16x128xi32>
    %234 = arith.sitofp %233 : vector<16x128xi32> to vector<16x128xf32>
    %235 = arith.addf %213, %234 : vector<16x128xf32>
    %cst_67 = arith.constant 2.000000e+00 : f32
    %236 = vector.broadcast %cst_67 : f32 to vector<16x128xf32>
    %237 = arith.mulf %0, %236 : vector<16x128xf32>
    %238 = arith.mulf %237, %237 : vector<16x128xf32>
    %239 = arith.mulf %238, %235 : vector<16x128xf32>
    %cst_68 = arith.constant 1.000000e+01 : f32
    %240 = vector.broadcast %cst_68 : f32 to vector<16x128xf32>
    %241 = arith.subf %240, %235 : vector<16x128xf32>
    %242 = arith.mulf %239, %241 : vector<16x128xf32>
    %cst_69 = arith.constant 0.0111111114 : f32
    %243 = vector.broadcast %cst_69 : f32 to vector<16x128xf32>
    %244 = arith.mulf %242, %243 : vector<16x128xf32>
    %c0_70 = arith.constant 0 : index
    %c0_71 = arith.constant 0 : index
    %245 = vector.load %arg3[%c0_70, %c0_71] : memref<16x128xf32, #tpu.memory_space<vmem>>, vector<16x128xf32>
    tpu.vector_store %arg3[%c0_70, %c0_71], %244 {strides = array<i32>} : memref<16x128xf32, #tpu.memory_space<vmem>>, vector<16x128xf32>,
    %c0_72 = arith.constant 0 : index
    %c0_73 = arith.constant 0 : index
    %246 = vector.load %arg4[%c0_72, %c0_73] : memref<16x128xf32, #tpu.memory_space<vmem>>, vector<16x128xf32>
    tpu.vector_store %arg4[%c0_72, %c0_73], %235 {strides = array<i32>} : memref<16x128xf32, #tpu.memory_space<vmem>>, vector<16x128xf32>,
    return
  }
  func.func @transform_0(%arg0: i32, %arg1: memref<1xi32, #tpu.memory_space<smem>>) -> (i32, i32) {
    %c0_i32 = arith.constant 0 : i32
    %c0_i32_0 = arith.constant 0 : i32
    return %arg0, %c0_i32 : i32, i32
  }
  func.func @transform_1(%arg0: i32, %arg1: memref<1xi32, #tpu.memory_space<smem>>) -> (i32, i32) {
    %c0_i32 = arith.constant 0 : i32
    %c0_i32_0 = arith.constant 0 : i32
    return %arg0, %c0_i32 : i32, i32
  }
  func.func @transform_2(%arg0: i32, %arg1: memref<1xi32, #tpu.memory_space<smem>>) -> (i32, i32) {
    %c0_i32 = arith.constant 0 : i32
    %c0_i32_0 = arith.constant 0 : i32
    return %arg0, %c0_i32 : i32, i32
  }
}

</mosaic_0001>

<llo_original>
// kernel: mc_dropout_uncertainty.1
$region0: #{mc_dropout_uncertainty.1}
  #allocation0 [shape = 'u32[]', space=smem, size = 0x4, offset = 0x4, fixed_abs, tag = 'smem constant byte address 0x4 - core index']
  #allocation1 [shape = 'u32[72,128]{1,0:T(1,128)}', space=vmem, size = 0x9000, scoped, tag = 'internal scratch']
  #allocation2 [shape = 's32[1]{0}', space=sflag, size = 0x4, scoped, tag = 'scoped memory for mc_dropout_uncertainty.1']
  #allocation3 [shape = 's32[1]{0:T(128)S(6)}', space=smem, size = 0x200, scoped, tag = 'prefetched SMEM operand 0']
  %s0 = inlined_call_operand.<no memory space> [shape: s32[1], index: 0, kind: input, shape index: {}]
  %s1 = inlined_call_operand.vmem [shape: f32[16,128], index: 1, kind: input, shape index: {}]
  %s2 = inlined_call_operand.vmem [shape: f32[16,128], index: 2, kind: output, shape index: {0}]
  %s3 = inlined_call_operand.vmem [shape: f32[16,128], index: 3, kind: output, shape index: {1}]
  %4 = xla_tuple %s2, %s3
  %s5 = sld [smem:[#allocation0]]
  $region22: #{mc_dropout_uncertainty.1} parent=0
    _
  %s7 = ssub.s32 1, %s5
  %s8 = scalar_select 0, %s7, %s5
  %9 = sst [smem:[#allocation3]] %s0
  // Predicated region
  $region2: #{mc_dropout_uncertainty.1} parent=0 // pred_check
    _
  $region3: #{mc_dropout_uncertainty.1} parent=0 // pred_check_branch
    %11 = sbr.rel (0) target = $region5
  $region4: #{mc_dropout_uncertainty.1} parent=0 // pred_region
    _
  $region5: #{mc_dropout_uncertainty.1} parent=0 // pred_fallthru
    _
  %v12 = vld [vmem:[%s1] sm:$0xff]
  %v13 = vld [vmem:[%s1 + $0x8] sm:$0xff]
  %v14 = vlaneseq
  %v15 = vshrl.u32 %v14, 7
  %v16 = vadd.s32 %v15, 8
  %v17 = vlaneseq
  %v18 = vand.u32 %v17, 127
  %s19 = smul.u32 0, 16
  %v20 = vstv %s19
  %v21 = vadd.s32 %v20, %v15
  %v22 = vadd.s32 %v20, %v16
  %v23 = vmul.u32 %v21, 128
  %v24 = vmul.u32 %v22, 128
  %v25 = vadd.s32 %v23, %v18
  %v26 = vadd.s32 %v24, %v18
  %s27 = sld [smem:[#allocation3]]
  %v28 = vmul.u32 %v25, 10
  %v29 = vmul.u32 %v26, 10
  %s30 = smul.u32 %s27, 2654435769
  %v31 = vstv %s30
  %v32 = vadd.s32 %v28, %v31
  %v33 = vadd.s32 %v29, %v31
  %v34 = vshrl.u32 %v32, 16
  %v35 = vshrl.u32 %v33, 16
  %v36 = vxor.u32 %v32, %v34
  %v37 = vxor.u32 %v33, %v35
  %v38 = vmul.u32 %v36, 2146121005
  %v39 = vmul.u32 %v37, 2146121005
  %v40 = vshrl.u32 %v38, 15
  %v41 = vshrl.u32 %v39, 15
  %v42 = vxor.u32 %v38, %v40
  %v43 = vxor.u32 %v39, %v41
  %v44 = vmul.u32 %v42, 2221713035
  %v45 = vmul.u32 %v43, 2221713035
  %v46 = vshrl.u32 %v44, 16
  %v47 = vshrl.u32 %v45, 16
  %v48 = vxor.u32 %v44, %v46
  %v49 = vxor.u32 %v45, %v47
  %v50 = vand.u32 %v48, 16777215
  %v51 = vand.u32 %v49, 16777215
  %vm52 = vcmp.lt.s32.totalorder %v50, 8388608
  %vm53 = vcmp.lt.s32.totalorder %v51, 8388608
  %v54 = vsel %vm52, 1, 0
  %v55 = vsel %vm53, 1, 0
  %v56 = vcvt.s32.f32 %v54
  %v57 = vcvt.s32.f32 %v55
  %v58 = vadd.f32 %v56, 0.0
  %v59 = vadd.f32 %v57, 0.0
  %v60 = vadd.s32 %v32, 1
  %v61 = vadd.s32 %v33, 1
  %v62 = vshrl.u32 %v60, 16
  %v63 = vshrl.u32 %v61, 16
  %v64 = vxor.u32 %v60, %v62
  %v65 = vxor.u32 %v61, %v63
  %v66 = vmul.u32 %v64, 2146121005
  %v67 = vmul.u32 %v65, 2146121005
  %v68 = vshrl.u32 %v66, 15
  %v69 = vshrl.u32 %v67, 15
  %v70 = vxor.u32 %v66, %v68
  %v71 = vxor.u32 %v67, %v69
  %v72 = vmul.u32 %v70, 2221713035
  %v73 = vmul.u32 %v71, 2221713035
  %v74 = vshrl.u32 %v72, 16
  %v75 = vshrl.u32 %v73, 16
  %v76 = vxor.u32 %v72, %v74
  %v77 = vxor.u32 %v73, %v75
  %v78 = vand.u32 %v76, 16777215
  %v79 = vand.u32 %v77, 16777215
  %vm80 = vcmp.lt.s32.totalorder %v78, 8388608
  %vm81 = vcmp.lt.s32.totalorder %v79, 8388608
  %v82 = vsel %vm80, 1, 0
  %v83 = vsel %vm81, 1, 0
  %v84 = vcvt.s32.f32 %v82
  %v85 = vcvt.s32.f32 %v83
  %v86 = vadd.f32 %v58, %v84
  %v87 = vadd.f32 %v59, %v85
  %v88 = vadd.s32 %v32, 2
  %v89 = vadd.s32 %v33, 2
  %v90 = vshrl.u32 %v88, 16
  %v91 = vshrl.u32 %v89, 16
  %v92 = vxor.u32 %v88, %v90
  %v93 = vxor.u32 %v89, %v91
  %v94 = vmul.u32 %v92, 2146121005
  %v95 = vmul.u32 %v93, 2146121005
  %v96 = vshrl.u32 %v94, 15
  %v97 = vshrl.u32 %v95, 15
  %v98 = vxor.u32 %v94, %v96
  %v99 = vxor.u32 %v95, %v97
  %v100 = vmul.u32 %v98, 2221713035
  %v101 = vmul.u32 %v99, 2221713035
  %v102 = vshrl.u32 %v100, 16
  %v103 = vshrl.u32 %v101, 16
  %v104 = vxor.u32 %v100, %v102
  %v105 = vxor.u32 %v101, %v103
  %v106 = vand.u32 %v104, 16777215
  %v107 = vand.u32 %v105, 16777215
  %vm108 = vcmp.lt.s32.totalorder %v106, 8388608
  %vm109 = vcmp.lt.s32.totalorder %v107, 8388608
  %v110 = vsel %vm108, 1, 0
  %v111 = vsel %vm109, 1, 0
  %v112 = vcvt.s32.f32 %v110
  %v113 = vcvt.s32.f32 %v111
  %v114 = vadd.f32 %v86, %v112
  %v115 = vadd.f32 %v87, %v113
  %v116 = vadd.s32 %v32, 3
  %v117 = vadd.s32 %v33, 3
  %v118 = vshrl.u32 %v116, 16
  %v119 = vshrl.u32 %v117, 16
  %v120 = vxor.u32 %v116, %v118
  %v121 = vxor.u32 %v117, %v119
  %v122 = vmul.u32 %v120, 2146121005
  %v123 = vmul.u32 %v121, 2146121005
  %v124 = vshrl.u32 %v122, 15
  %v125 = vshrl.u32 %v123, 15
  %v126 = vxor.u32 %v122, %v124
  %v127 = vxor.u32 %v123, %v125
  %v128 = vmul.u32 %v126, 2221713035
  %v129 = vmul.u32 %v127, 2221713035
  %v130 = vshrl.u32 %v128, 16
  %v131 = vshrl.u32 %v129, 16
  %v132 = vxor.u32 %v128, %v130
  %v133 = vxor.u32 %v129, %v131
  %v134 = vand.u32 %v132, 16777215
  %v135 = vand.u32 %v133, 16777215
  %vm136 = vcmp.lt.s32.totalorder %v134, 8388608
  %vm137 = vcmp.lt.s32.totalorder %v135, 8388608
  %v138 = vsel %vm136, 1, 0
  %v139 = vsel %vm137, 1, 0
  %v140 = vcvt.s32.f32 %v138
  %v141 = vcvt.s32.f32 %v139
  %v142 = vadd.f32 %v114, %v140
  %v143 = vadd.f32 %v115, %v141
  %v144 = vadd.s32 %v32, 4
  %v145 = vadd.s32 %v33, 4
  %v146 = vshrl.u32 %v144, 16
  %v147 = vshrl.u32 %v145, 16
  %v148 = vxor.u32 %v144, %v146
  %v149 = vxor.u32 %v145, %v147
  %v150 = vmul.u32 %v148, 2146121005
  %v151 = vmul.u32 %v149, 2146121005
  %v152 = vshrl.u32 %v150, 15
  %v153 = vshrl.u32 %v151, 15
  %v154 = vxor.u32 %v150, %v152
  %v155 = vxor.u32 %v151, %v153
  %v156 = vmul.u32 %v154, 2221713035
  %v157 = vmul.u32 %v155, 2221713035
  %v158 = vshrl.u32 %v156, 16
  %v159 = vshrl.u32 %v157, 16
  %v160 = vxor.u32 %v156, %v158
  %v161 = vxor.u32 %v157, %v159
  %v162 = vand.u32 %v160, 16777215
  %v163 = vand.u32 %v161, 16777215
  %vm164 = vcmp.lt.s32.totalorder %v162, 8388608
  %vm165 = vcmp.lt.s32.totalorder %v163, 8388608
  %v166 = vsel %vm164, 1, 0
  %v167 = vsel %vm165, 1, 0
  %v168 = vcvt.s32.f32 %v166
  %v169 = vcvt.s32.f32 %v167
  %v170 = vadd.f32 %v142, %v168
  %v171 = vadd.f32 %v143, %v169
  %v172 = vadd.s32 %v32, 5
  %v173 = vadd.s32 %v33, 5
  %v174 = vshrl.u32 %v172, 16
  %v175 = vshrl.u32 %v173, 16
  %v176 = vxor.u32 %v172, %v174
  %v177 = vxor.u32 %v173, %v175
  %v178 = vmul.u32 %v176, 2146121005
  %v179 = vmul.u32 %v177, 2146121005
  %v180 = vshrl.u32 %v178, 15
  %v181 = vshrl.u32 %v179, 15
  %v182 = vxor.u32 %v178, %v180
  %v183 = vxor.u32 %v179, %v181
  %v184 = vmul.u32 %v182, 2221713035
  %v185 = vmul.u32 %v183, 2221713035
  %v186 = vshrl.u32 %v184, 16
  %v187 = vshrl.u32 %v185, 16
  %v188 = vxor.u32 %v184, %v186
  %v189 = vxor.u32 %v185, %v187
  %v190 = vand.u32 %v188, 16777215
  %v191 = vand.u32 %v189, 16777215
  %vm192 = vcmp.lt.s32.totalorder %v190, 8388608
  %vm193 = vcmp.lt.s32.totalorder %v191, 8388608
  %v194 = vsel %vm192, 1, 0
  %v195 = vsel %vm193, 1, 0
  %v196 = vcvt.s32.f32 %v194
  %v197 = vcvt.s32.f32 %v195
  %v198 = vadd.f32 %v170, %v196
  %v199 = vadd.f32 %v171, %v197
  %v200 = vadd.s32 %v32, 6
  %v201 = vadd.s32 %v33, 6
  %v202 = vshrl.u32 %v200, 16
  %v203 = vshrl.u32 %v201, 16
  %v204 = vxor.u32 %v200, %v202
  %v205 = vxor.u32 %v201, %v203
  %v206 = vmul.u32 %v204, 2146121005
  %v207 = vmul.u32 %v205, 2146121005
  %v208 = vshrl.u32 %v206, 15
  %v209 = vshrl.u32 %v207, 15
  %v210 = vxor.u32 %v206, %v208
  %v211 = vxor.u32 %v207, %v209
  %v212 = vmul.u32 %v210, 2221713035
  %v213 = vmul.u32 %v211, 2221713035
  %v214 = vshrl.u32 %v212, 16
  %v215 = vshrl.u32 %v213, 16
  %v216 = vxor.u32 %v212, %v214
  %v217 = vxor.u32 %v213, %v215
  %v218 = vand.u32 %v216, 16777215
  %v219 = vand.u32 %v217, 16777215
  %vm220 = vcmp.lt.s32.totalorder %v218, 8388608
  %vm221 = vcmp.lt.s32.totalorder %v219, 8388608
  %v222 = vsel %vm220, 1, 0
  %v223 = vsel %vm221, 1, 0
  %v224 = vcvt.s32.f32 %v222
  %v225 = vcvt.s32.f32 %v223
  %v226 = vadd.f32 %v198, %v224
  %v227 = vadd.f32 %v199, %v225
  %v228 = vadd.s32 %v32, 7
  %v229 = vadd.s32 %v33, 7
  %v230 = vshrl.u32 %v228, 16
  %v231 = vshrl.u32 %v229, 16
  %v232 = vxor.u32 %v228, %v230
  %v233 = vxor.u32 %v229, %v231
  %v234 = vmul.u32 %v232, 2146121005
  %v235 = vmul.u32 %v233, 2146121005
  %v236 = vshrl.u32 %v234, 15
  %v237 = vshrl.u32 %v235, 15
  %v238 = vxor.u32 %v234, %v236
  %v239 = vxor.u32 %v235, %v237
  %v240 = vmul.u32 %v238, 2221713035
  %v241 = vmul.u32 %v239, 2221713035
  %v242 = vshrl.u32 %v240, 16
  %v243 = vshrl.u32 %v241, 16
  %v244 = vxor.u32 %v240, %v242
  %v245 = vxor.u32 %v241, %v243
  %v246 = vand.u32 %v244, 16777215
  %v247 = vand.u32 %v245, 16777215
  %vm248 = vcmp.lt.s32.totalorder %v246, 8388608
  %vm249 = vcmp.lt.s32.totalorder %v247, 8388608
  %v250 = vsel %vm248, 1, 0
  %v251 = vsel %vm249, 1, 0
  %v252 = vcvt.s32.f32 %v250
  %v253 = vcvt.s32.f32 %v251
  %v254 = vadd.f32 %v226, %v252
  %v255 = vadd.f32 %v227, %v253
  %v256 = vadd.s32 %v32, 8
  %v257 = vadd.s32 %v33, 8
  %v258 = vshrl.u32 %v256, 16
  %v259 = vshrl.u32 %v257, 16
  %v260 = vxor.u32 %v256, %v258
  %v261 = vxor.u32 %v257, %v259
  %v262 = vmul.u32 %v260, 2146121005
  %v263 = vmul.u32 %v261, 2146121005
  %v264 = vshrl.u32 %v262, 15
  %v265 = vshrl.u32 %v263, 15
  %v266 = vxor.u32 %v262, %v264
  %v267 = vxor.u32 %v263, %v265
  %v268 = vmul.u32 %v266, 2221713035
  %v269 = vmul.u32 %v267, 2221713035
  %v270 = vshrl.u32 %v268, 16
  %v271 = vshrl.u32 %v269, 16
  %v272 = vxor.u32 %v268, %v270
  %v273 = vxor.u32 %v269, %v271
  %v274 = vand.u32 %v272, 16777215
  %v275 = vand.u32 %v273, 16777215
  %vm276 = vcmp.lt.s32.totalorder %v274, 8388608
  %vm277 = vcmp.lt.s32.totalorder %v275, 8388608
  %v278 = vsel %vm276, 1, 0
  %v279 = vsel %vm277, 1, 0
  %v280 = vcvt.s32.f32 %v278
  %v281 = vcvt.s32.f32 %v279
  %v282 = vadd.f32 %v254, %v280
  %v283 = vadd.f32 %v255, %v281
  %v284 = vadd.s32 %v32, 9
  %v285 = vadd.s32 %v33, 9
  %v286 = vshrl.u32 %v284, 16
  %v287 = vshrl.u32 %v285, 16
  %v288 = vxor.u32 %v284, %v286
  %v289 = vxor.u32 %v285, %v287
  %v290 = vmul.u32 %v288, 2146121005
  %v291 = vmul.u32 %v289, 2146121005
  %v292 = vshrl.u32 %v290, 15
  %v293 = vshrl.u32 %v291, 15
  %v294 = vxor.u32 %v290, %v292
  %v295 = vxor.u32 %v291, %v293
  %v296 = vmul.u32 %v294, 2221713035
  %v297 = vmul.u32 %v295, 2221713035
  %v298 = vshrl.u32 %v296, 16
  %v299 = vshrl.u32 %v297, 16
  %v300 = vxor.u32 %v296, %v298
  %v301 = vxor.u32 %v297, %v299
  %v302 = vand.u32 %v300, 16777215
  %v303 = vand.u32 %v301, 16777215
  %vm304 = vcmp.lt.s32.totalorder %v302, 8388608
  %vm305 = vcmp.lt.s32.totalorder %v303, 8388608
  %v306 = vsel %vm304, 1, 0
  %v307 = vsel %vm305, 1, 0
  %v308 = vcvt.s32.f32 %v306
  %v309 = vcvt.s32.f32 %v307
  %v310 = vadd.f32 %v282, %v308
  %v311 = vadd.f32 %v283, %v309
  %v312 = vmul.f32 %v12, 2.0
  %v313 = vmul.f32 %v13, 2.0
  %v314 = vmul.f32 %v312, %v312
  %v315 = vmul.f32 %v313, %v313
  %v316 = vmul.f32 %v314, %v310
  %v317 = vmul.f32 %v315, %v311
  %v318 = vsub.f32 10.0, %v310
  %v319 = vsub.f32 10.0, %v311
  %v320 = vmul.f32 %v316, %v318
  %v321 = vmul.f32 %v317, %v319
  %v322 = vmul.f32 %v320, 0.011111111
  %v323 = vmul.f32 %v321, 0.011111111
  %324 = vst [vmem:[%s2] sm:$0xff] %v322
  %325 = vst [vmem:[%s2 + $0x8] sm:$0xff] %v323
  %326 = vst [vmem:[%s3] sm:$0xff] %v310
  %327 = vst [vmem:[%s3 + $0x8] sm:$0xff] %v311
  // Predicated region
  $region6: #{mc_dropout_uncertainty.1} parent=0 // pred_check
    _
  $region7: #{mc_dropout_uncertainty.1} parent=0 // pred_check_branch
    %329 = sbr.rel (0) target = $region9
  $region8: #{mc_dropout_uncertainty.1} parent=0 // pred_region
    _
  $region9: #{mc_dropout_uncertainty.1} parent=0 // pred_fallthru
    _
  // Predicated region
  $region10: #{mc_dropout_uncertainty.1} parent=0 // pred_check
    _
  $region11: #{mc_dropout_uncertainty.1} parent=0 // pred_check_branch
    %331 = sbr.rel (0) target = $region13
  $region12: #{mc_dropout_uncertainty.1} parent=0 // pred_region
    _
  $region13: #{mc_dropout_uncertainty.1} parent=0 // pred_fallthru
    _
  // Predicated region
  $region14: #{mc_dropout_uncertainty.1} parent=0 // pred_check
    _
  $region15: #{mc_dropout_uncertainty.1} parent=0 // pred_check_branch
    %333 = sbr.rel (0) target = $region17
  $region16: #{mc_dropout_uncertainty.1} parent=0 // pred_region
    _
  $region17: #{mc_dropout_uncertainty.1} parent=0 // pred_fallthru
    _
  // Predicated region
  $region18: #{mc_dropout_uncertainty.1} parent=0 // pred_check
    _
  $region19: #{mc_dropout_uncertainty.1} parent=0 // pred_check_branch
    %335 = sbr.rel (0) target = $region21
  $region20: #{mc_dropout_uncertainty.1} parent=0 // pred_region
    _
  $region21: #{mc_dropout_uncertainty.1} parent=0 // pred_fallthru
    _

</llo_original>
